<compile_context>
chip_gen: v7x
topology: tpu7x:2x2x1
jax: 0.10.0
libtpu: 0.0.40
codegen_flags: <defaults>
</compile_context>

<pallas_src>
import jax
import jax.numpy as jnp
from jax.experimental import pallas as pl
from jax.experimental.pallas import tpu as pltpu

SCALE_FACTOR = 2.0  # self.scale_factor set via set_control_vector()


def _mlp_cv_kernel(x_ref, wg_ref, wu_ref, wd_ref, cvu_ref, o_ref, acc_ref):
    k = pl.program_id(1)  # intermediate-dim (reduction) axis

    @pl.when(k == 0)
    def _():
        acc_ref[...] = jnp.zeros_like(acc_ref)

    # --- base_layer: gated MLP. bf16 operands on the MXU, f32 accumulation ---
    x = x_ref[...]                                                    # (tm, H) bf16
    g = jnp.dot(x, wg_ref[...], preferred_element_type=jnp.float32)   # (tm, tk) f32
    u = jnp.dot(x, wu_ref[...], preferred_element_type=jnp.float32)   # (tm, tk) f32
    act = (g * jax.nn.sigmoid(g)) * u                                 # SiLU(g) * u
    acc_ref[...] += jnp.dot(act.astype(wd_ref.dtype), wd_ref[...],
                            preferred_element_type=jnp.float32)       # (tm, H) f32

    # --- control-vector steering epilogue, once per token block -------------
    @pl.when(k == pl.num_programs(1) - 1)
    def _():
        h = acc_ref[...]                          # (tm, H) f32
        cv_unit = cvu_ref[...]                    # (1, H)  f32, pre-normalized

        # Fused row reductions over h (single pass).
        sum_hh = jnp.sum(h * h, axis=-1, keepdims=True)          # ||h||^2   (tm,1)
        dot_hc = jnp.sum(h * cv_unit, axis=-1, keepdims=True)    # h . cv_u  (tm,1)

        norm_pre = jnp.sqrt(sum_hh)                              # ||h||
        # 1 / max(||h||, 1e-12)  -> EUP rsqrt, no VALU divide
        inv_h = jax.lax.rsqrt(jnp.maximum(sum_hh, 1e-24))

        # cos_sim(h, -cv) = -(h . cv_unit) / max(||h||, 1e-8)
        # (per-norm eps clamp; differs from torch only for degenerate norms)
        cos = -dot_hc * pl.reciprocal(jnp.maximum(norm_pre, 1e-8), approx=True)
        lam = 1.0 + jnp.maximum(0.0, cos)                        # (tm, 1)

        y = SCALE_FACTOR * lam * cv_unit                         # (tm, H)
        z = h * inv_h + y
        inv_z = jax.lax.rsqrt(
            jnp.maximum(jnp.sum(z * z, axis=-1, keepdims=True), 1e-24))
        o_ref[...] = (z * (inv_z * norm_pre)).astype(o_ref.dtype)


def mlp_with_control_vector(x, w_gate, w_up, w_down, cv, *, tm=256, tk=512):
    """x: (T, H); w_gate/w_up: (H, I); w_down: (I, H); cv: (H,). Returns bf16 (T, H).

    Defaults tm=256, tk=512 target v6e/v5e VMEM budgets; on v7x (64 MiB VMEM)
    prefer tk=256..512 so double-buffered weight tiles still fit.
    """
    T, H = x.shape
    I = w_gate.shape[1]
    assert w_gate.shape == (H, I) and w_up.shape == (H, I) and w_down.shape == (I, H)
    assert cv.shape == (H,)
    # TODO(synk): pad T/H/I for shapes not divisible by the (8,128)/(16,128) tiling.
    assert H % 128 == 0, "hidden dim must be lane-dense (multiple of 128)"
    tm = min(tm, T)
    tk = min(tk, I)
    assert T % tm == 0 and tm % 8 == 0, "token tile must divide T and be 8-aligned"
    assert I % tk == 0 and tk % 128 == 0, "intermediate tile must divide I, 128-aligned"

    # bf16 matmul operands: native MXU rate on v5e/v6e/v7x, half the DMA bytes.
    x_bf = x.astype(jnp.bfloat16)
    wg_bf = w_gate.astype(jnp.bfloat16)
    wu_bf = w_up.astype(jnp.bfloat16)
    wd_bf = w_down.astype(jnp.bfloat16)

    # Hoist the grid-invariant cv normalization out of the kernel.
    cv32 = cv.astype(jnp.float32)
    cv_unit = (cv32 / jnp.maximum(jnp.linalg.norm(cv32), 1e-12)).reshape(1, H)

    grid = (T // tm, I // tk)  # (parallel token blocks, reduction over I last)

    cost = pl.CostEstimate(
        flops=6 * T * H * I,                              # 3 matmuls
        transcendentals=T * I + 4 * T,                    # sigmoid + rsqrt/recip
        bytes_accessed=2 * (T * H) + 2 * 3 * H * I + 4 * H + 2 * T * H)

    return pl.pallas_call(
        _mlp_cv_kernel,
        out_shape=jax.ShapeDtypeStruct((T, H), jnp.bfloat16),
        grid_spec=pltpu.PrefetchScalarGridSpec(
            num_scalar_prefetch=0,
            grid=grid,
            in_specs=[
                pl.BlockSpec((tm, H), lambda t, k: (t, 0)),   # x: resident per t-block
                pl.BlockSpec((H, tk), lambda t, k: (0, k)),   # w_gate tile (streamed)
                pl.BlockSpec((H, tk), lambda t, k: (0, k)),   # w_up tile (streamed)
                pl.BlockSpec((tk, H), lambda t, k: (k, 0)),   # w_down tile (streamed)
                pl.BlockSpec((1, H), lambda t, k: (0, 0)),    # pre-normalized cv
            ],
            out_specs=pl.BlockSpec((tm, H), lambda t, k: (t, 0)),
            scratch_shapes=[pltpu.VMEM((tm, H), jnp.float32)],  # f32 accumulator
        ),
        compiler_params=pltpu.CompilerParams(
            dimension_semantics=("parallel", "arbitrary"),
            vmem_limit_bytes=48 * 1024 * 1024),
        cost_estimate=cost,
    )(x_bf, wg_bf, wu_bf, wd_bf, cv_unit)


def _reference(x, w_gate, w_up, w_down, cv):
    """Pure-JAX reference mirroring the PyTorch forward with the kernel's
    precision policy (bf16 matmul operands, f32 steering epilogue)."""
    xb = x.astype(jnp.bfloat16).astype(jnp.float32)
    wg = w_gate.astype(jnp.bfloat16).astype(jnp.float32)
    wu = w_up.astype(jnp.bfloat16).astype(jnp.float32)
    wd = w_down.astype(jnp.bfloat16).astype(jnp.float32)
    g = xb @ wg
    u = xb @ wu
    act = (g * jax.nn.sigmoid(g)) * u
    h = act.astype(jnp.bfloat16).astype(jnp.float32) @ wd
    norm_pre = jnp.linalg.norm(h, axis=-1, keepdims=True)
    cv32 = cv.astype(jnp.float32)
    cv_unit = cv32 / jnp.maximum(jnp.linalg.norm(cv32), 1e-12)
    cos = jnp.sum(h * (-cv_unit)[None, :], -1, keepdims=True) / jnp.maximum(
        norm_pre, 1e-8)
    lam = 1.0 + jnp.maximum(0.0, cos)
    y = SCALE_FACTOR * lam * cv_unit[None, :]
    z = h / jnp.maximum(norm_pre, 1e-12) + y
    z = z / jnp.maximum(jnp.linalg.norm(z, axis=-1, keepdims=True), 1e-12)
    return (z * norm_pre).astype(jnp.bfloat16)


if __name__ == "__main__":
    # Small but lane-dense shapes: tokens=32, hidden=128, intermediate=256.
    T, H, I = 32, 128, 256
    key = jax.random.PRNGKey(0)
    kx, kg, ku, kd, kc = jax.random.split(key, 5)

    x = jax.random.normal(kx, (T, H), jnp.float32)
    w_gate = jax.random.normal(kg, (H, I), jnp.float32) * 0.1
    w_up = jax.random.normal(ku, (H, I), jnp.float32) * 0.1
    w_down = jax.random.normal(kd, (I, H), jnp.float32) * 0.1
    cv = jax.random.normal(kc, (H,), jnp.float32)

    # tm=16, tk=128 -> grid (2, 2): exercises both the parallel token axis and
    # the accumulated reduction over the intermediate dimension.
    out = mlp_with_control_vector(x, w_gate, w_up, w_down, cv, tm=16, tk=128)
    out = jax.block_until_ready(out)

    ref = _reference(x, w_gate, w_up, w_down, cv)
    assert out.shape == (T, H) and out.dtype == jnp.bfloat16
    assert jnp.allclose(out.astype(jnp.float32), ref.astype(jnp.float32),
                        rtol=5e-2, atol=5e-2), (
        float(jnp.max(jnp.abs(out.astype(jnp.float32) - ref.astype(jnp.float32)))))
    print("KERNEL_OK")
</pallas_src>

<mosaic_0001>
module attributes {stable_mosaic.version = 11 : i64} {
  func.func @_mlp_cv_kernel(%arg0: i32, %arg1: i32, %arg2: memref<16x128xbf16, #tpu.memory_space<vmem>>, %arg3: memref<128x128xbf16, #tpu.memory_space<vmem>>, %arg4: memref<128x128xbf16, #tpu.memory_space<vmem>>, %arg5: memref<128x128xbf16, #tpu.memory_space<vmem>>, %arg6: memref<1x128xf32, #tpu.memory_space<vmem>>, %arg7: memref<16x128xbf16, #tpu.memory_space<vmem>>, %arg8: memref<16x128xf32, #tpu.memory_space<vmem>>) attributes {dimension_semantics = [#tpu.dimension_semantics<parallel>, #tpu.dimension_semantics<arbitrary>], iteration_bounds = array<i64: 2, 2>, scalar_prefetch = 0 : i64, scratch_operands = 1 : i64, tpu.core_type = #tpu.core_type<tc>, window_params = [{transform_indices = @transform_0, window_bounds = array<i64: 16, 128>}, {transform_indices = @transform_1, window_bounds = array<i64: 128, 128>}, {transform_indices = @transform_2, window_bounds = array<i64: 128, 128>}, {transform_indices = @transform_3, window_bounds = array<i64: 128, 128>}, {pipeline_mode = #tpu.pipeline_mode<synchronous>, transform_indices = @transform_4, window_bounds = array<i64: 1, 128>}, {transform_indices = @transform_5, window_bounds = array<i64: 16, 128>}]} {
    %c0_i32 = arith.constant 0 : i32
    %0 = arith.cmpi eq, %arg1, %c0_i32 : i32
    %1 = arith.extui %0 : i1 to i32
    %c0_i32_0 = arith.constant 0 : i32
    %2 = arith.cmpi ne, %1, %c0_i32_0 : i32
    scf.if %2 {
      %cst_16 = arith.constant 0.000000e+00 : f32
      %24 = vector.broadcast %cst_16 : f32 to vector<16x128xf32>
      %c0_17 = arith.constant 0 : index
      %c0_18 = arith.constant 0 : index
      %25 = vector.load %arg8[%c0_17, %c0_18] : memref<16x128xf32, #tpu.memory_space<vmem>>, vector<16x128xf32>
      tpu.vector_store %arg8[%c0_17, %c0_18], %24 {strides = array<i32>} : memref<16x128xf32, #tpu.memory_space<vmem>>, vector<16x128xf32>,
    } else {
    }
    %c0 = arith.constant 0 : index
    %c0_1 = arith.constant 0 : index
    %3 = vector.load %arg2[%c0, %c0_1] : memref<16x128xbf16, #tpu.memory_space<vmem>>, vector<16x128xbf16>
    %c0_2 = arith.constant 0 : index
    %c0_3 = arith.constant 0 : index
    %4 = vector.load %arg3[%c0_2, %c0_3] : memref<128x128xbf16, #tpu.memory_space<vmem>>, vector<128x128xbf16>
    %cst = arith.constant dense<0.000000e+00> : vector<16x128xf32>
    %5 = tpu.matmul %3, %4, %cst {dimension_numbers = #tpu.dot_dimension_numbers<[1], [0], [0], [1], [0, 0, 1, 1], [], []>} : vector<16x128xbf16>, vector<128x128xbf16>, vector<16x128xf32> -> vector<16x128xf32>
    %c0_4 = arith.constant 0 : index
    %c0_5 = arith.constant 0 : index
    %6 = vector.load %arg4[%c0_4, %c0_5] : memref<128x128xbf16, #tpu.memory_space<vmem>>, vector<128x128xbf16>
    %cst_6 = arith.constant dense<0.000000e+00> : vector<16x128xf32>
    %7 = tpu.matmul %3, %6, %cst_6 {dimension_numbers = #tpu.dot_dimension_numbers<[1], [0], [0], [1], [0, 0, 1, 1], [], []>} : vector<16x128xbf16>, vector<128x128xbf16>, vector<16x128xf32> -> vector<16x128xf32>
    %8 = arith.negf %5 : vector<16x128xf32>
    %9 = math.exp %8 : vector<16x128xf32>
    %cst_7 = arith.constant 1.000000e+00 : f32
    %10 = vector.broadcast %cst_7 : f32 to vector<16x128xf32>
    %11 = arith.addf %10, %9 : vector<16x128xf32>
    %12 = arith.divf %10, %11 : vector<16x128xf32>
    %13 = arith.mulf %5, %12 : vector<16x128xf32>
    %14 = arith.mulf %13, %7 : vector<16x128xf32>
    %c0_8 = arith.constant 0 : index
    %c0_9 = arith.constant 0 : index
    %15 = vector.load %arg8[%c0_8, %c0_9] : memref<16x128xf32, #tpu.memory_space<vmem>>, vector<16x128xf32>
    %16 = arith.truncf %14 : vector<16x128xf32> to vector<16x128xbf16>
    %c0_10 = arith.constant 0 : index
    %c0_11 = arith.constant 0 : index
    %17 = vector.load %arg5[%c0_10, %c0_11] : memref<128x128xbf16, #tpu.memory_space<vmem>>, vector<128x128xbf16>
    %cst_12 = arith.constant dense<0.000000e+00> : vector<16x128xf32>
    %18 = tpu.matmul %16, %17, %cst_12 {dimension_numbers = #tpu.dot_dimension_numbers<[1], [0], [0], [1], [0, 0, 1, 1], [], []>} : vector<16x128xbf16>, vector<128x128xbf16>, vector<16x128xf32> -> vector<16x128xf32>
    %19 = arith.addf %15, %18 : vector<16x128xf32>
    %c0_13 = arith.constant 0 : index
    %c0_14 = arith.constant 0 : index
    %20 = vector.load %arg8[%c0_13, %c0_14] : memref<16x128xf32, #tpu.memory_space<vmem>>, vector<16x128xf32>
    tpu.vector_store %arg8[%c0_13, %c0_14], %19 {strides = array<i32>} : memref<16x128xf32, #tpu.memory_space<vmem>>, vector<16x128xf32>,
    %c1_i32 = arith.constant 1 : i32
    %21 = arith.cmpi eq, %arg1, %c1_i32 : i32
    %22 = arith.extui %21 : i1 to i32
    %c0_i32_15 = arith.constant 0 : i32
    %23 = arith.cmpi ne, %22, %c0_i32_15 : i32
    scf.if %23 {
      %c0_16 = arith.constant 0 : index
      %c0_17 = arith.constant 0 : index
      %24 = vector.load %arg8[%c0_16, %c0_17] : memref<16x128xf32, #tpu.memory_space<vmem>>, vector<16x128xf32>
      %c0_18 = arith.constant 0 : index
      %c0_19 = arith.constant 0 : index
      %25 = vector.load %arg6[%c0_18, %c0_19] : memref<1x128xf32, #tpu.memory_space<vmem>>, vector<1x128xf32>
      %26 = arith.mulf %24, %24 : vector<16x128xf32>
      %cst_20 = arith.constant dense<0.000000e+00> : vector<16xf32>
      %27 = vector.multi_reduction <add>, %26, %cst_20 [1] : vector<16x128xf32> to vector<16xf32>
      %28 = vector.shape_cast %27 : vector<16xf32> to vector<16x1xf32>
      %29 = vector.broadcast %25 : vector<1x128xf32> to vector<16x128xf32>
      %30 = arith.mulf %24, %29 : vector<16x128xf32>
      %cst_21 = arith.constant dense<0.000000e+00> : vector<16xf32>
      %31 = vector.multi_reduction <add>, %30, %cst_21 [1] : vector<16x128xf32> to vector<16xf32>
      %32 = vector.shape_cast %31 : vector<16xf32> to vector<16x1xf32>
      %33 = math.sqrt %28 : vector<16x1xf32>
      %cst_22 = arith.constant 1.000000e-24 : f32
      %34 = vector.broadcast %cst_22 : f32 to vector<16x1xf32>
      %35 = arith.maximumf %28, %34 : vector<16x1xf32>
      %36 = math.rsqrt %35 : vector<16x1xf32>
      %cst_23 = arith.constant 0.000000e+00 : f32
      %37 = vector.broadcast %cst_23 : f32 to vector<16x1xf32>
      %38 = arith.subf %37, %32 : vector<16x1xf32>
      %cst_24 = arith.constant 9.99999993E-9 : f32
      %39 = vector.broadcast %cst_24 : f32 to vector<16x1xf32>
      %40 = arith.maximumf %33, %39 : vector<16x1xf32>
      %41 = tpu.reciprocal %40 {approx = true} : vector<16x1xf32> -> vector<16x1xf32>
      %42 = arith.mulf %38, %41 : vector<16x1xf32>
      %cst_25 = arith.constant 0.000000e+00 : f32
      %43 = vector.broadcast %cst_25 : f32 to vector<16x1xf32>
      %44 = arith.maximumf %43, %42 : vector<16x1xf32>
      %cst_26 = arith.constant 1.000000e+00 : f32
      %45 = vector.broadcast %cst_26 : f32 to vector<16x1xf32>
      %46 = arith.addf %45, %44 : vector<16x1xf32>
      %cst_27 = arith.constant 2.000000e+00 : f32
      %47 = vector.broadcast %cst_27 : f32 to vector<16x1xf32>
      %48 = arith.mulf %47, %46 : vector<16x1xf32>
      %49 = vector.broadcast %48 : vector<16x1xf32> to vector<16x128xf32>
      %50 = vector.broadcast %25 : vector<1x128xf32> to vector<16x128xf32>
      %51 = arith.mulf %49, %50 : vector<16x128xf32>
      %52 = vector.broadcast %36 : vector<16x1xf32> to vector<16x128xf32>
      %53 = arith.mulf %24, %52 : vector<16x128xf32>
      %54 = arith.addf %53, %51 : vector<16x128xf32>
      %55 = arith.mulf %54, %54 : vector<16x128xf32>
      %cst_28 = arith.constant dense<0.000000e+00> : vector<16xf32>
      %56 = vector.multi_reduction <add>, %55, %cst_28 [1] : vector<16x128xf32> to vector<16xf32>
      %57 = vector.shape_cast %56 : vector<16xf32> to vector<16x1xf32>
      %cst_29 = arith.constant 1.000000e-24 : f32
      %58 = vector.broadcast %cst_29 : f32 to vector<16x1xf32>
      %59 = arith.maximumf %57, %58 : vector<16x1xf32>
      %60 = math.rsqrt %59 : vector<16x1xf32>
      %61 = arith.mulf %60, %33 : vector<16x1xf32>
      %62 = vector.broadcast %61 : vector<16x1xf32> to vector<16x128xf32>
      %63 = arith.mulf %54, %62 : vector<16x128xf32>
      %64 = arith.truncf %63 : vector<16x128xf32> to vector<16x128xbf16>
      %c0_30 = arith.constant 0 : index
      %c0_31 = arith.constant 0 : index
      %65 = vector.load %arg7[%c0_30, %c0_31] : memref<16x128xbf16, #tpu.memory_space<vmem>>, vector<16x128xbf16>
      tpu.vector_store %arg7[%c0_30, %c0_31], %64 {strides = array<i32>} : memref<16x128xbf16, #tpu.memory_space<vmem>>, vector<16x128xbf16>,
    } else {
    }
    return
  }
  func.func @transform_0(%arg0: i32, %arg1: i32) -> (i32, i32) {
    %c0_i32 = arith.constant 0 : i32
    %c0_i32_0 = arith.constant 0 : i32
    return %arg0, %c0_i32 : i32, i32
  }
  func.func @transform_1(%arg0: i32, %arg1: i32) -> (i32, i32) {
    %c0_i32 = arith.constant 0 : i32
    %c0_i32_0 = arith.constant 0 : i32
    return %c0_i32, %arg1 : i32, i32
  }
  func.func @transform_2(%arg0: i32, %arg1: i32) -> (i32, i32) {
    %c0_i32 = arith.constant 0 : i32
    %c0_i32_0 = arith.constant 0 : i32
    return %c0_i32, %arg1 : i32, i32
  }
  func.func @transform_3(%arg0: i32, %arg1: i32) -> (i32, i32) {
    %c0_i32 = arith.constant 0 : i32
    %c0_i32_0 = arith.constant 0 : i32
    return %arg1, %c0_i32 : i32, i32
  }
  func.func @transform_4(%arg0: i32, %arg1: i32) -> (i32, i32) {
    %c0_i32 = arith.constant 0 : i32
    %c0_i32_0 = arith.constant 0 : i32
    %c0_i32_1 = arith.constant 0 : i32
    return %c0_i32, %c0_i32_0 : i32, i32
  }
  func.func @transform_5(%arg0: i32, %arg1: i32) -> (i32, i32) {
    %c0_i32 = arith.constant 0 : i32
    %c0_i32_0 = arith.constant 0 : i32
    return %arg0, %c0_i32 : i32, i32
  }
}

</mosaic_0001>

<llo_original>
// kernel: tpu_custom_call.1
$region0: #{tpu_custom_call.1}
  #allocation0 [shape = 'u32[]', space=smem, size = 0x4, offset = 0x4, fixed_abs, tag = 'smem constant byte address 0x4 - core index']
  #allocation1 [shape = 'u32[144,128]{1,0:T(1,128)}', space=vmem, size = 0x12000, scoped, tag = 'internal scratch']
  #allocation2 [shape = 'f32[16,128]{1,0:T(8,128)}', space=vmem, size = 0x2000, scoped, tag = 'scratch operand']
  %s0 = inlined_call_operand.hbm [shape: bf16[32,128], index: 0, kind: input, shape index: {}]
  %s1 = inlined_call_operand.hbm [shape: bf16[128,256], index: 1, kind: input, shape index: {}]
  %s2 = inlined_call_operand.hbm [shape: bf16[128,256], index: 2, kind: input, shape index: {}]
  %s3 = inlined_call_operand.hbm [shape: bf16[256,128], index: 3, kind: input, shape index: {}]
  %s4 = inlined_call_operand.vmem [shape: f32[1,128], index: 4, kind: input, shape index: {}]
  %s5 = inlined_call_operand.hbm [shape: bf16[32,128], index: 5, kind: output, shape index: {}]
  %s6 = sld [smem:[#allocation0]]
  $region77: #{tpu_custom_call.1} parent=0
    _
  %s8 = ssub.s32 1, %s6
  %s9 = scalar_select 0, %s8, %s6
  $region1: #{tpu_custom_call.1} parent=0
    #allocation3 [shape = 'u8[8192]{0}', space=vmem, size = 0x2000, scoped, tag = 'input window, operand 0']
    #allocation4 [shape = 's32[2]{0}', space=sflag, size = 0x8, scoped, tag = 'scoped memory for tpu_custom_call.1']
    #allocation5 [shape = 's32[2]{0}', space=sflag, size = 0x8, scoped, tag = 'scoped memory for tpu_custom_call.1']
    #allocation6 [shape = 'u8[65536]{0}', space=vmem, size = 0x10000, scoped, tag = 'input window, operand 1']
    #allocation7 [shape = 's32[2]{0}', space=sflag, size = 0x8, scoped, tag = 'scoped memory for tpu_custom_call.1']
    #allocation8 [shape = 'u8[65536]{0}', space=vmem, size = 0x10000, scoped, tag = 'input window, operand 2']
    #allocation9 [shape = 'u8[65536]{0}', space=vmem, size = 0x10000, scoped, tag = 'input window, operand 3']
    #allocation10 [shape = 's32[2]{0}', space=sflag, size = 0x8, scoped, tag = 'scoped memory for tpu_custom_call.1']
    #allocation11 [shape = 'u8[8192]{0}', space=vmem, size = 0x2000, scoped, tag = 'output window, operand 0']
    %10 = vsyncpa [#allocation4], 0
    %s11 = scalar_lea.sflag [#allocation4], 1
    %12 = vsyncpa %s11, 0
    %13 = vsyncpa [#allocation7], 0
    %s14 = scalar_lea.sflag [#allocation7], 1
    %15 = vsyncpa %s14, 0
    %16 = vsyncpa [#allocation10], 0
    %s17 = scalar_lea.sflag [#allocation10], 1
    %18 = vsyncpa %s17, 0
    %19 = vsyncpa [#allocation5], 0
    %s20 = scalar_lea.sflag [#allocation5], 1
    %21 = vsyncpa %s20, 0
    loop: start=0, step=1, limit=6
    $region2: #{tpu_custom_call.1} parent=1 // loop_pre_header
      _
    $region3: #{tpu_custom_call.1} parent=1 // loop_header
      %s23 = sphi 0, %s27
      %p24 = scmp.ge.s32.totalorder %s23, 6
      %s30 = sphi 0, %s42
      %s31 = sphi 0, %s38
      %s32 = sphi 0, %s30
      %s33 = sphi 0, %s31
      %s34 = sphi 0, %s32
      %s35 = sphi 0, %s33
      %s45 = sphi 0, %s47
      %s48 = sphi 0, %s45
      %s49 = sphi 0, %s48
      %s65 = sphi 0, %s49
      %s71 = sphi 0, %s73
      %s74 = sphi 0, %s71
      %s75 = sphi 0, %s74
      %s91 = sphi 0, %s75
      %s97 = sphi 0, %s99
      %s100 = sphi 0, %s97
      %s101 = sphi 0, %s100
      %s117 = sphi 0, %s101
      %s123 = sphi 0, %s125
      %s126 = sphi 0, %s123
      %s127 = sphi 0, %s126
      %s143 = sphi 0, %s127
      %s147 = sphi 0, %s147
      %s149 = sphi 0, %s147
      %s150 = sphi 0, %s149
      %s164 = sphi 0, %s150
      %s170 = sphi 0, %s172
      %s173 = sphi 0, %s170
      %s174 = sphi 0, %s173
      %s190 = sphi 0, %s174
    $region4: #{tpu_custom_call.1} parent=1 // loop_header_branch
      %26 = sbr.rel (%p24) target = $region8
    $region5: #{tpu_custom_call.1} parent=1 // loop_body
      %s28 = ssub.s32 %s23, 1
      %s29 = ssub.s32 %s23, 2
      %s36 = sadd.s32 1, %s31
      %p37 = scmp.ge.s32.totalorder %s36, 2
      %s38 = scalar_select %p37, 0, %s36
      %s39 = sadd.s32 1, %s30
      %s40 = scalar_select %p37, %s39, %s30
      %p41 = scmp.ge.s32.totalorder %s40, 2
      %s42 = scalar_select %p41, 0, %s40
      %s43 = ssub.s32 %s30, %s42
      %p44 = scmp.eq.s32.totalorder %s43, 0
      %s46 = sadd.s32 %s45, 1
      %s47 = scalar_select %p44, %s45, %s46
      %p50 = pneg %p44
      %p51 = scmp.eq.s32.totalorder %s23, 3
      %p52 = por %p50, %p51
      %p53 = scmp.ne.s32.totalorder %s45, %s48
      %p54 = scmp.eq.s32.totalorder %s23, 0
      %p55 = por %p53, %p54
      %p56 = scmp.ne.s32.totalorder %s45, %s48
      %p57 = scmp.eq.s32.totalorder %s28, 3
      %p58 = por %p56, %p57
      %p59 = scmp.ne.s32.totalorder %s48, %s49
      %p60 = scmp.eq.s32.totalorder %s28, 0
      %p61 = por %p59, %p60
      %p62 = scmp.ne.s32.totalorder %s48, %s49
      %p63 = scmp.eq.s32.totalorder %s29, 3
      %p64 = por %p62, %p63
      %p66 = scmp.ne.s32.totalorder %s49, %s65
      %p67 = scmp.eq.s32.totalorder %s29, 0
      %p68 = por %p66, %p67
      %s69 = ssub.s32 %s31, %s38
      %p70 = scmp.eq.s32.totalorder %s69, 0
      %s72 = sadd.s32 %s71, 1
      %s73 = scalar_select %p70, %s71, %s72
      %p76 = pneg %p70
      %p77 = scmp.eq.s32.totalorder %s23, 3
      %p78 = por %p76, %p77
      %p79 = scmp.ne.s32.totalorder %s71, %s74
      %p80 = scmp.eq.s32.totalorder %s23, 0
      %p81 = por %p79, %p80
      %p82 = scmp.ne.s32.totalorder %s71, %s74
      %p83 = scmp.eq.s32.totalorder %s28, 3
      %p84 = por %p82, %p83
      %p85 = scmp.ne.s32.totalorder %s74, %s75
      %p86 = scmp.eq.s32.totalorder %s28, 0
      %p87 = por %p85, %p86
      %p88 = scmp.ne.s32.totalorder %s74, %s75
      %p89 = scmp.eq.s32.totalorder %s29, 3
      %p90 = por %p88, %p89
      %p92 = scmp.ne.s32.totalorder %s75, %s91
      %p93 = scmp.eq.s32.totalorder %s29, 0
      %p94 = por %p92, %p93
      %s95 = ssub.s32 %s31, %s38
      %p96 = scmp.eq.s32.totalorder %s95, 0
      %s98 = sadd.s32 %s97, 1
      %s99 = scalar_select %p96, %s97, %s98
      %p102 = pneg %p96
      %p103 = scmp.eq.s32.totalorder %s23, 3
      %p104 = por %p102, %p103
      %p105 = scmp.ne.s32.totalorder %s97, %s100
      %p106 = scmp.eq.s32.totalorder %s23, 0
      %p107 = por %p105, %p106
      %p108 = scmp.ne.s32.totalorder %s97, %s100
      %p109 = scmp.eq.s32.totalorder %s28, 3
      %p110 = por %p108, %p109
      %p111 = scmp.ne.s32.totalorder %s100, %s101
      %p112 = scmp.eq.s32.totalorder %s28, 0
      %p113 = por %p111, %p112
      %p114 = scmp.ne.s32.totalorder %s100, %s101
      %p115 = scmp.eq.s32.totalorder %s29, 3
      %p116 = por %p114, %p115
      %p118 = scmp.ne.s32.totalorder %s101, %s117
      %p119 = scmp.eq.s32.totalorder %s29, 0
      %p120 = por %p118, %p119
      %s121 = ssub.s32 %s31, %s38
      %p122 = scmp.eq.s32.totalorder %s121, 0
      %s124 = sadd.s32 %s123, 1
      %s125 = scalar_select %p122, %s123, %s124
      %p128 = pneg %p122
      %p129 = scmp.eq.s32.totalorder %s23, 3
      %p130 = por %p128, %p129
      %p131 = scmp.ne.s32.totalorder %s123, %s126
      %p132 = scmp.eq.s32.totalorder %s23, 0
      %p133 = por %p131, %p132
      %p134 = scmp.ne.s32.totalorder %s123, %s126
      %p135 = scmp.eq.s32.totalorder %s28, 3
      %p136 = por %p134, %p135
      %p137 = scmp.ne.s32.totalorder %s126, %s127
      %p138 = scmp.eq.s32.totalorder %s28, 0
      %p139 = por %p137, %p138
      %p140 = scmp.ne.s32.totalorder %s126, %s127
      %p141 = scmp.eq.s32.totalorder %s29, 3
      %p142 = por %p140, %p141
      %p144 = scmp.ne.s32.totalorder %s127, %s143
      %p145 = scmp.eq.s32.totalorder %s29, 0
      %p146 = por %p144, %p145
      %s148 = sadd.s32 %s147, 1
      %p151 = scmp.eq.s32.totalorder %s23, 3
      %p152 = scmp.ne.s32.totalorder %s147, %s149
      %p153 = scmp.eq.s32.totalorder %s23, 0
      %p154 = por %p152, %p153
      %p155 = scmp.ne.s32.totalorder %s147, %s149
      %p156 = scmp.eq.s32.totalorder %s28, 3
      %p157 = por %p155, %p156
      %p158 = scmp.ne.s32.totalorder %s149, %s150
      %p159 = scmp.eq.s32.totalorder %s28, 0
      %p160 = por %p158, %p159
      %p161 = scmp.ne.s32.totalorder %s149, %s150
      %p162 = scmp.eq.s32.totalorder %s29, 3
      %p163 = por %p161, %p162
      %p165 = scmp.ne.s32.totalorder %s150, %s164
      %p166 = scmp.eq.s32.totalorder %s29, 0
      %p167 = por %p165, %p166
      %s168 = ssub.s32 %s30, %s42
      %p169 = scmp.eq.s32.totalorder %s168, 0
      %s171 = sadd.s32 %s170, 1
      %s172 = scalar_select %p169, %s170, %s171
      %p175 = pneg %p169
      %p176 = scmp.eq.s32.totalorder %s23, 3
      %p177 = por %p175, %p176
      %p178 = scmp.ne.s32.totalorder %s170, %s173
      %p179 = scmp.eq.s32.totalorder %s23, 0
      %p180 = por %p178, %p179
      %p181 = scmp.ne.s32.totalorder %s170, %s173
      %p182 = scmp.eq.s32.totalorder %s28, 3
      %p183 = por %p181, %p182
      %p184 = scmp.ne.s32.totalorder %s173, %s174
      %p185 = scmp.eq.s32.totalorder %s28, 0
      %p186 = por %p184, %p185
      %p187 = scmp.ne.s32.totalorder %s173, %s174
      %p188 = scmp.eq.s32.totalorder %s29, 3
      %p189 = por %p187, %p188
      %p191 = scmp.ne.s32.totalorder %s174, %s190
      %p192 = scmp.eq.s32.totalorder %s29, 0
      %p193 = por %p191, %p192
      %p194 = scmp.le.s32.totalorder 1, %s23
      %p195 = scmp.lt.s32.totalorder %s23, 5
      %p196 = pnand %p194, %p195
      %p197 = pneg %p196
      // Predicated region
      $region9: #{tpu_custom_call.1} parent=5 // pred_check
        _
      $region10: #{tpu_custom_call.1} parent=5 // pred_check_branch
        %199 = sbr.rel (%p196) target = $region12
      $region11: #{tpu_custom_call.1} parent=5 // pred_region
        %s200 = ssub.s32 %s23, 1
        // Predicated region
        $region13: #{tpu_custom_call.1} parent=11 // pred_check
          %p201 = pneg %p160
        $region14: #{tpu_custom_call.1} parent=11 // pred_check_branch
          %203 = sbr.rel (%p201) target = $region16
        $region15: #{tpu_custom_call.1} parent=11 // pred_region
          _
        $region16: #{tpu_custom_call.1} parent=11 // pred_fallthru
          _
      $region12: #{tpu_custom_call.1} parent=5 // pred_fallthru
        _
      %p204 = scmp.lt.s32.totalorder %s23, 4
      // Predicated region
      $region17: #{tpu_custom_call.1} parent=5 // pred_check
        %p205 = pneg %p204
      $region18: #{tpu_custom_call.1} parent=5 // pred_check_branch
        %207 = sbr.rel (%p205) target = $region20
      $region19: #{tpu_custom_call.1} parent=5 // pred_region
        // Predicated region
        $region21: #{tpu_custom_call.1} parent=19 // pred_check
          %p208 = pneg %p55
        $region22: #{tpu_custom_call.1} parent=19 // pred_check_branch
          %210 = sbr.rel (%p208) target = $region24
        $region23: #{tpu_custom_call.1} parent=19 // pred_region
          %s211 = sand.u32 %s45, 1
          %s212 = scalar_lea.sflag [#allocation4], %s211
          %s213 = sand.u32 %s45, 1
          %s214 = smul.addr %s213, 8
          %s215 = scalar_lea.vmem [#allocation3], %s214
          %s216 = smul.u32 2, %s30
          %s218 = ssub.s32 128, 128
          %219 = vsyncadd %s212, %s218
          %s220 = smul.addr %s216, 64
          %s221 = scalar_lea.hbm %s0, %s220
          %s222 = sshll.u32 %s215, 4
          %s223 = int_to_ptr.vmem [resolvable:$true] %s222
          %228 = dma.hbm_to_vmem [thread:$0]  %s221, 128, %s223, %s212, 64, 64, 4
        $region24: #{tpu_custom_call.1} parent=19 // pred_fallthru
          _
        // Predicated region
        $region25: #{tpu_custom_call.1} parent=19 // pred_check
          %p229 = pneg %p81
        $region26: #{tpu_custom_call.1} parent=19 // pred_check_branch
          %231 = sbr.rel (%p229) target = $region28
        $region27: #{tpu_custom_call.1} parent=19 // pred_region
          %s232 = sand.u32 %s23, 1
          %s233 = scalar_lea.sflag [#allocation7], %s232
          %s234 = sand.u32 %s71, 1
          %s235 = smul.addr %s234, 64
          %s236 = scalar_lea.vmem [#allocation6], %s235
          %s238 = ssub.s32 1024, 1024
          %239 = vsyncadd %s233, %s238
          %s240 = smul.addr %s31, 64
          %s241 = scalar_lea.hbm %s1, %s240
          %s242 = sshll.u32 %s236, 4
          %s243 = int_to_ptr.vmem [resolvable:$true] %s242
          %248 = dma.hbm_to_vmem [thread:$0]  %s241, 1024, %s243, %s233, 128, 64, 4
        $region28: #{tpu_custom_call.1} parent=19 // pred_fallthru
          _
        // Predicated region
        $region29: #{tpu_custom_call.1} parent=19 // pred_check
          %p249 = pneg %p107
        $region30: #{tpu_custom_call.1} parent=19 // pred_check_branch
          %251 = sbr.rel (%p249) target = $region32
        $region31: #{tpu_custom_call.1} parent=19 // pred_region
          %s252 = sand.u32 %s23, 1
          %s253 = scalar_lea.sflag [#allocation7], %s252
          %s254 = sand.u32 %s97, 1
          %s255 = smul.addr %s254, 64
          %s256 = scalar_lea.vmem [#allocation8], %s255
          %s258 = ssub.s32 1024, 1024
          %259 = vsyncadd %s253, %s258
          %s260 = smul.addr %s31, 64
          %s261 = scalar_lea.hbm %s2, %s260
          %s262 = sshll.u32 %s256, 4
          %s263 = int_to_ptr.vmem [resolvable:$true] %s262
          %268 = dma.hbm_to_vmem [thread:$0]  %s261, 1024, %s263, %s253, 128, 64, 4
        $region32: #{tpu_custom_call.1} parent=19 // pred_fallthru
          _
        // Predicated region
        $region33: #{tpu_custom_call.1} parent=19 // pred_check
          %p269 = pneg %p133
        $region34: #{tpu_custom_call.1} parent=19 // pred_check_branch
          %271 = sbr.rel (%p269) target = $region36
        $region35: #{tpu_custom_call.1} parent=19 // pred_region
          %s272 = sand.u32 %s123, 1
          %s273 = scalar_lea.sflag [#allocation10], %s272
          %s274 = sand.u32 %s123, 1
          %s275 = smul.addr %s274, 64
          %s276 = scalar_lea.vmem [#allocation9], %s275
          %s277 = smul.u32 16, %s31
          %s279 = ssub.s32 1024, 1024
          %280 = vsyncadd %s273, %s279
          %s281 = smul.addr %s277, 64
          %s282 = scalar_lea.hbm %s3, %s281
          %s283 = sshll.u32 %s276, 4
          %s284 = int_to_ptr.vmem [resolvable:$true] %s283
          %289 = dma.hbm_to_vmem [thread:$0]  %s282, 1024, %s284, %s273, 64, 64, 4
        $region36: #{tpu_custom_call.1} parent=19 // pred_fallthru
          _
      $region20: #{tpu_custom_call.1} parent=5 // pred_fallthru
        _
      %p290 = scmp.le.s32.totalorder 1, %s23
      %p291 = scmp.lt.s32.totalorder %s23, 5
      %p292 = pnand %p290, %p291
      %p293 = pneg %p292
      // Predicated region
      $region37: #{tpu_custom_call.1} parent=5 // pred_check
        _
      $region38: #{tpu_custom_call.1} parent=5 // pred_check_branch
        %295 = sbr.rel (%p292) target = $region40
      $region39: #{tpu_custom_call.1} parent=5 // pred_region
        %s296 = ssub.s32 %s23, 1
        %s297 = sand.u32 %s48, 1
        %s298 = scalar_lea.sflag [#allocation4], %s297
        %s299 = sand.u32 %s48, 1
        %s300 = smul.addr %s299, 8
        %s301 = scalar_lea.vmem [#allocation3], %s300
        // Predicated region
        $region41: #{tpu_custom_call.1} parent=39 // pred_check
          %p302 = pneg %p61
        $region42: #{tpu_custom_call.1} parent=39 // pred_check_branch
          %304 = sbr.rel (%p302) target = $region44
        $region43: #{tpu_custom_call.1} parent=39 // pred_region
          %305 = dma.done %s298, 128
        $region44: #{tpu_custom_call.1} parent=39 // pred_fallthru
          _
        %s306 = sand.u32 %s28, 1
        %s307 = scalar_lea.sflag [#allocation7], %s306
        %s308 = sand.u32 %s74, 1
        %s309 = smul.addr %s308, 64
        %s310 = scalar_lea.vmem [#allocation6], %s309
        // Predicated region
        $region45: #{tpu_custom_call.1} parent=39 // pred_check
          %p311 = pneg %p87
        $region46: #{tpu_custom_call.1} parent=39 // pred_check_branch
          %313 = sbr.rel (%p311) target = $region48
        $region47: #{tpu_custom_call.1} parent=39 // pred_region
          %314 = dma.done %s307, 1024
        $region48: #{tpu_custom_call.1} parent=39 // pred_fallthru
          _
        %s315 = sand.u32 %s28, 1
        %s316 = scalar_lea.sflag [#allocation7], %s315
        %s317 = sand.u32 %s100, 1
        %s318 = smul.addr %s317, 64
        %s319 = scalar_lea.vmem [#allocation8], %s318
        // Predicated region
        $region49: #{tpu_custom_call.1} parent=39 // pred_check
          %p320 = pneg %p113
        $region50: #{tpu_custom_call.1} parent=39 // pred_check_branch
          %322 = sbr.rel (%p320) target = $region52
        $region51: #{tpu_custom_call.1} parent=39 // pred_region
          %323 = dma.done %s316, 1024
        $region52: #{tpu_custom_call.1} parent=39 // pred_fallthru
          _
        %s324 = sand.u32 %s126, 1
        %s325 = scalar_lea.sflag [#allocation10], %s324
        %s326 = sand.u32 %s126, 1
        %s327 = smul.addr %s326, 64
        %s328 = scalar_lea.vmem [#allocation9], %s327
        // Predicated region
        $region53: #{tpu_custom_call.1} parent=39 // pred_check
          %p329 = pneg %p139
        $region54: #{tpu_custom_call.1} parent=39 // pred_check_branch
          %331 = sbr.rel (%p329) target = $region56
        $region55: #{tpu_custom_call.1} parent=39 // pred_region
          %332 = dma.done %s325, 1024
        $region56: #{tpu_custom_call.1} parent=39 // pred_fallthru
          _
        %s333 = sand.u32 %s48, 1
        %s334 = scalar_lea.sflag [#allocation4], %s333
        %s335 = sand.u32 %s48, 1
        %s336 = smul.addr %s335, 8
        %s337 = scalar_lea.vmem [#allocation3], %s336
        %p338 = pneg %p61
        %p339 = pneg %p58
        %s340 = sand.u32 %s28, 1
        %s341 = scalar_lea.sflag [#allocation7], %s340
        %s342 = sand.u32 %s74, 1
        %s343 = smul.addr %s342, 64
        %s344 = scalar_lea.vmem [#allocation6], %s343
        %p345 = pneg %p87
        %p346 = pneg %p84
        %s347 = sand.u32 %s28, 1
        %s348 = scalar_lea.sflag [#allocation7], %s347
        %s349 = sand.u32 %s100, 1
        %s350 = smul.addr %s349, 64
        %s351 = scalar_lea.vmem [#allocation8], %s350
        %p352 = pneg %p113
        %p353 = pneg %p110
        %s354 = sand.u32 %s126, 1
        %s355 = scalar_lea.sflag [#allocation10], %s354
        %s356 = sand.u32 %s126, 1
        %s357 = smul.addr %s356, 64
        %s358 = scalar_lea.vmem [#allocation9], %s357
        %p359 = pneg %p139
        %p360 = pneg %p136
        %p361 = pneg %p160
        %p362 = pneg %p157
        %p363 = pneg %p186
        %p364 = pneg %p183
        %s365 = sand.u32 %s173, 1
        %s366 = scalar_lea.sflag [#allocation5], %s365
        %s367 = sand.u32 %s173, 1
        %s368 = smul.addr %s367, 8
        %s369 = scalar_lea.vmem [#allocation11], %s368
        %s370 = smul.u32 2, %s32
        %s371 = smul.u32 16, %s33
        %s372 = smul.u32 2, %s32
        %p374 = scmp.eq.s32.totalorder %s33, 0
        // Predicated region
        $region57: #{tpu_custom_call.1} parent=39 // pred_check
          %p375 = pneg %p374
        $region58: #{tpu_custom_call.1} parent=39 // pred_check_branch
          %377 = sbr.rel (%p375) target = $region60
        $region59: #{tpu_custom_call.1} parent=39 // pred_region
          %378 = vst [vmem:[#allocation2] sm:$0xff] 0.0
          %379 = vst [vmem:[#allocation2 + $0x8] sm:$0xff] 0.0
        $region60: #{tpu_custom_call.1} parent=39 // pred_fallthru
          _
        %v380 = vld [vmem:[%s301] sm:$0xf]
        %v381 = vld [vmem:[%s301 + $0x4] sm:$0xf]
        %v382 = vld [vmem:[%s310] sm:$0xf]
        %v383 = vld [vmem:[%s310 + $0x4] sm:$0xf]
        %v384 = vld [vmem:[%s310 + $0x8] sm:$0xf]
        %v385 = vld [vmem:[%s310 + $0xc] sm:$0xf]
        %v386 = vld [vmem:[%s310 + $0x10] sm:$0xf]
        %v387 = vld [vmem:[%s310 + $0x14] sm:$0xf]
        %v388 = vld [vmem:[%s310 + $0x18] sm:$0xf]
        %v389 = vld [vmem:[%s310 + $0x1c] sm:$0xf]
        %v390 = vld [vmem:[%s310 + $0x20] sm:$0xf]
        %v391 = vld [vmem:[%s310 + $0x24] sm:$0xf]
        %v392 = vld [vmem:[%s310 + $0x28] sm:$0xf]
        %v393 = vld [vmem:[%s310 + $0x2c] sm:$0xf]
        %v394 = vld [vmem:[%s310 + $0x30] sm:$0xf]
        %v395 = vld [vmem:[%s310 + $0x34] sm:$0xf]
        %v396 = vld [vmem:[%s310 + $0x38] sm:$0xf]
        %v397 = vld [vmem:[%s310 + $0x3c] sm:$0xf]
        %v400 = vunpack.c.l.b16 %v380
        %v401 = vunpack.c.l.b16 %v381
        %v402 = vpack.c.b16 %v401, %v400
        %v420 = vunpack.c.l.b16 %v382
        %v421 = vunpack.c.l.b16 %v383
        %v422 = vunpack.c.l.b16 %v384
        %v423 = vunpack.c.l.b16 %v385
        %v424 = vunpack.c.l.b16 %v386
        %v425 = vunpack.c.l.b16 %v387
        %v426 = vunpack.c.l.b16 %v388
        %v427 = vunpack.c.l.b16 %v389
        %v428 = vunpack.c.l.b16 %v390
        %v429 = vunpack.c.l.b16 %v391
        %v430 = vunpack.c.l.b16 %v392
        %v431 = vunpack.c.l.b16 %v393
        %v432 = vunpack.c.l.b16 %v394
        %v433 = vunpack.c.l.b16 %v395
        %v434 = vunpack.c.l.b16 %v396
        %v435 = vunpack.c.l.b16 %v397
        %v436 = vpack.c.b16 %v421, %v420
        %v437 = vpack.c.b16 %v423, %v422
        %v438 = vpack.c.b16 %v425, %v424
        %v439 = vpack.c.b16 %v427, %v426
        %v440 = vpack.c.b16 %v429, %v428
        %v441 = vpack.c.b16 %v431, %v430
        %v442 = vpack.c.b16 %v433, %v432
        %v443 = vpack.c.b16 %v435, %v434
        %452 = vmatprep.subr.bf16.mxu0 0
        %453 = vmatpush1.bf16.msra.mxu0 %v436
        %454 = vmatprep.subr.bf16.mxu0 0
        %455 = vmatpush1.bf16.msra.mxu0 %v437
        %456 = vmatprep.subr.bf16.mxu0 0
        %457 = vmatpush1.bf16.msra.mxu0 %v438
        %458 = vmatprep.subr.bf16.mxu0 0
        %459 = vmatpush1.bf16.msra.mxu0 %v439
        %460 = vmatprep.subr.bf16.mxu0 0
        %461 = vmatpush1.bf16.msra.mxu0 %v440
        %462 = vmatprep.subr.bf16.mxu0 0
        %463 = vmatpush1.bf16.msra.mxu0 %v441
        %464 = vmatprep.subr.bf16.mxu0 0
        %465 = vmatpush1.bf16.msra.mxu0 %v442
        %466 = vmatprep.subr.bf16.mxu0 0
        %467 = vmatpush1.bf16.msra.mxu0 %v443
        %468 = vmatprep.subr.bf16.mxu0 0
        %469 = vmatpush1.bf16.msra.mxu0 0
        %470 = vmatprep.subr.bf16.mxu0 0
        %471 = vmatpush1.bf16.msra.mxu0 0
        %472 = vmatprep.subr.bf16.mxu0 0
        %473 = vmatpush1.bf16.msra.mxu0 0
        %474 = vmatprep.subr.bf16.mxu0 0
        %475 = vmatpush1.bf16.msra.mxu0 0
        %476 = vmatprep.subr.bf16.mxu0 0
        %477 = vmatpush1.bf16.msra.mxu0 0
        %478 = vmatprep.subr.bf16.mxu0 0
        %479 = vmatpush1.bf16.msra.mxu0 0
        %480 = vmatprep.subr.bf16.mxu0 0
        %481 = vmatpush1.bf16.msra.mxu0 0
        %482 = vmatprep.subr.bf16.mxu0 0
        %483 = vmatpush1.bf16.msra.mxu0 0
        %484 = vmatprep.mubr.bf16.mxu0 0
        %485 = vmatmul.mubr.bf16.gmra.mrb[0].mxu0 %v402
        %v486 = vpop.f32.mrb[0].mxu0
        %v487 = vadd.f32 0.0, %v486
        %v488 = vpop.f32.mrb[0].mxu0
        %v489 = vpop.f32.mrb[0].mxu0
        %v490 = vadd.f32 0.0, %v489
        %v491 = vpop.f32.mrb[0].mxu0
        %492 = vdwg.mxu0
        %v493 = vld [vmem:[%s319] sm:$0xf]
        %v494 = vld [vmem:[%s319 + $0x4] sm:$0xf]
        %v495 = vld [vmem:[%s319 + $0x8] sm:$0xf]
        %v496 = vld [vmem:[%s319 + $0xc] sm:$0xf]
        %v497 = vld [vmem:[%s319 + $0x10] sm:$0xf]
        %v498 = vld [vmem:[%s319 + $0x14] sm:$0xf]
        %v499 = vld [vmem:[%s319 + $0x18] sm:$0xf]
        %v500 = vld [vmem:[%s319 + $0x1c] sm:$0xf]
        %v501 = vld [vmem:[%s319 + $0x20] sm:$0xf]
        %v502 = vld [vmem:[%s319 + $0x24] sm:$0xf]
        %v503 = vld [vmem:[%s319 + $0x28] sm:$0xf]
        %v504 = vld [vmem:[%s319 + $0x2c] sm:$0xf]
        %v505 = vld [vmem:[%s319 + $0x30] sm:$0xf]
        %v506 = vld [vmem:[%s319 + $0x34] sm:$0xf]
        %v507 = vld [vmem:[%s319 + $0x38] sm:$0xf]
        %v508 = vld [vmem:[%s319 + $0x3c] sm:$0xf]
        %v525 = vunpack.c.l.b16 %v493
        %v526 = vunpack.c.l.b16 %v494
        %v527 = vunpack.c.l.b16 %v495
        %v528 = vunpack.c.l.b16 %v496
        %v529 = vunpack.c.l.b16 %v497
        %v530 = vunpack.c.l.b16 %v498
        %v531 = vunpack.c.l.b16 %v499
        %v532 = vunpack.c.l.b16 %v500
        %v533 = vunpack.c.l.b16 %v501
        %v534 = vunpack.c.l.b16 %v502
        %v535 = vunpack.c.l.b16 %v503
        %v536 = vunpack.c.l.b16 %v504
        %v537 = vunpack.c.l.b16 %v505
        %v538 = vunpack.c.l.b16 %v506
        %v539 = vunpack.c.l.b16 %v507
        %v540 = vunpack.c.l.b16 %v508
        %v541 = vpack.c.b16 %v526, %v525
        %v542 = vpack.c.b16 %v528, %v527
        %v543 = vpack.c.b16 %v530, %v529
        %v544 = vpack.c.b16 %v532, %v531
        %v545 = vpack.c.b16 %v534, %v533
        %v546 = vpack.c.b16 %v536, %v535
        %v547 = vpack.c.b16 %v538, %v537
        %v548 = vpack.c.b16 %v540, %v539
        %557 = vmatprep.subr.bf16.mxu0 0
        %558 = vmatpush1.bf16.msra.mxu0 %v541
        %559 = vmatprep.subr.bf16.mxu0 0
        %560 = vmatpush1.bf16.msra.mxu0 %v542
        %561 = vmatprep.subr.bf16.mxu0 0
        %562 = vmatpush1.bf16.msra.mxu0 %v543
        %563 = vmatprep.subr.bf16.mxu0 0
        %564 = vmatpush1.bf16.msra.mxu0 %v544
        %565 = vmatprep.subr.bf16.mxu0 0
        %566 = vmatpush1.bf16.msra.mxu0 %v545
        %567 = vmatprep.subr.bf16.mxu0 0
        %568 = vmatpush1.bf16.msra.mxu0 %v546
        %569 = vmatprep.subr.bf16.mxu0 0
        %570 = vmatpush1.bf16.msra.mxu0 %v547
        %571 = vmatprep.subr.bf16.mxu0 0
        %572 = vmatpush1.bf16.msra.mxu0 %v548
        %573 = vmatprep.subr.bf16.mxu0 0
        %574 = vmatpush1.bf16.msra.mxu0 0
        %575 = vmatprep.subr.bf16.mxu0 0
        %576 = vmatpush1.bf16.msra.mxu0 0
        %577 = vmatprep.subr.bf16.mxu0 0
        %578 = vmatpush1.bf16.msra.mxu0 0
        %579 = vmatprep.subr.bf16.mxu0 0
        %580 = vmatpush1.bf16.msra.mxu0 0
        %581 = vmatprep.subr.bf16.mxu0 0
        %582 = vmatpush1.bf16.msra.mxu0 0
        %583 = vmatprep.subr.bf16.mxu0 0
        %584 = vmatpush1.bf16.msra.mxu0 0
        %585 = vmatprep.subr.bf16.mxu0 0
        %586 = vmatpush1.bf16.msra.mxu0 0
        %587 = vmatprep.subr.bf16.mxu0 0
        %588 = vmatpush1.bf16.msra.mxu0 0
        %589 = vmatprep.mubr.bf16.mxu0 0
        %590 = vmatmul.mubr.bf16.gmra.mrb[0].mxu0 %v402
        %v591 = vpop.f32.mrb[0].mxu0
        %v592 = vadd.f32 0.0, %v591
        %v593 = vpop.f32.mrb[0].mxu0
        %v594 = vpop.f32.mrb[0].mxu0
        %v595 = vadd.f32 0.0, %v594
        %v596 = vpop.f32.mrb[0].mxu0
        %597 = vdwg.mxu0
        %v598 = vxor.u32 %v487, 2147483648
        %v599 = vxor.u32 %v490, 2147483648
        %v600 = vmul.f32 %v598, 1.442695
        %v601 = vpow.pop %v600
        %v602 = vmul.f32 %v599, 1.442695
        %v603 = vpow.pop %v602
        %v604 = vadd.f32 %v601, 1.0
        %v605 = vadd.f32 %v603, 1.0
        %v606 = vrcp.pop %v604
        %v607 = vmul.f32 1.0, %v606
        %v608 = vrcp.pop %v605
        %v609 = vmul.f32 1.0, %v608
        %v610 = vmul.f32 %v487, %v607
        %v611 = vmul.f32 %v490, %v609
        %v612 = vmul.f32 %v610, %v592
        %v613 = vmul.f32 %v611, %v595
        %v614 = vld [vmem:[#allocation2] sm:$0xff]
        %v615 = vld [vmem:[#allocation2 + $0x8] sm:$0xff]
        %v616 = vpack.c.bf16 %v613, %v612
        %v617 = vld [vmem:[%s328] sm:$0xf]
        %v618 = vld [vmem:[%s328 + $0x4] sm:$0xf]
        %v619 = vld [vmem:[%s328 + $0x8] sm:$0xf]
        %v620 = vld [vmem:[%s328 + $0xc] sm:$0xf]
        %v621 = vld [vmem:[%s328 + $0x10] sm:$0xf]
        %v622 = vld [vmem:[%s328 + $0x14] sm:$0xf]
        %v623 = vld [vmem:[%s328 + $0x18] sm:$0xf]
        %v624 = vld [vmem:[%s328 + $0x1c] sm:$0xf]
        %v625 = vld [vmem:[%s328 + $0x20] sm:$0xf]
        %v626 = vld [vmem:[%s328 + $0x24] sm:$0xf]
        %v627 = vld [vmem:[%s328 + $0x28] sm:$0xf]
        %v628 = vld [vmem:[%s328 + $0x2c] sm:$0xf]
        %v629 = vld [vmem:[%s328 + $0x30] sm:$0xf]
        %v630 = vld [vmem:[%s328 + $0x34] sm:$0xf]
        %v631 = vld [vmem:[%s328 + $0x38] sm:$0xf]
        %v632 = vld [vmem:[%s328 + $0x3c] sm:$0xf]
        %v649 = vunpack.c.l.b16 %v617
        %v650 = vunpack.c.l.b16 %v618
        %v651 = vunpack.c.l.b16 %v619
        %v652 = vunpack.c.l.b16 %v620
        %v653 = vunpack.c.l.b16 %v621
        %v654 = vunpack.c.l.b16 %v622
        %v655 = vunpack.c.l.b16 %v623
        %v656 = vunpack.c.l.b16 %v624
        %v657 = vunpack.c.l.b16 %v625
        %v658 = vunpack.c.l.b16 %v626
        %v659 = vunpack.c.l.b16 %v627
        %v660 = vunpack.c.l.b16 %v628
        %v661 = vunpack.c.l.b16 %v629
        %v662 = vunpack.c.l.b16 %v630
        %v663 = vunpack.c.l.b16 %v631
        %v664 = vunpack.c.l.b16 %v632
        %v665 = vpack.c.b16 %v650, %v649
        %v666 = vpack.c.b16 %v652, %v651
        %v667 = vpack.c.b16 %v654, %v653
        %v668 = vpack.c.b16 %v656, %v655
        %v669 = vpack.c.b16 %v658, %v657
        %v670 = vpack.c.b16 %v660, %v659
        %v671 = vpack.c.b16 %v662, %v661
        %v672 = vpack.c.b16 %v664, %v663
        %681 = vmatprep.subr.bf16.mxu0 0
        %682 = vmatpush1.bf16.msra.mxu0 %v665
        %683 = vmatprep.subr.bf16.mxu0 0
        %684 = vmatpush1.bf16.msra.mxu0 %v666
        %685 = vmatprep.subr.bf16.mxu0 0
        %686 = vmatpush1.bf16.msra.mxu0 %v667
        %687 = vmatprep.subr.bf16.mxu0 0
        %688 = vmatpush1.bf16.msra.mxu0 %v668
        %689 = vmatprep.subr.bf16.mxu0 0
        %690 = vmatpush1.bf16.msra.mxu0 %v669
        %691 = vmatprep.subr.bf16.mxu0 0
        %692 = vmatpush1.bf16.msra.mxu0 %v670
        %693 = vmatprep.subr.bf16.mxu0 0
        %694 = vmatpush1.bf16.msra.mxu0 %v671
        %695 = vmatprep.subr.bf16.mxu0 0
        %696 = vmatpush1.bf16.msra.mxu0 %v672
        %697 = vmatprep.subr.bf16.mxu0 0
        %698 = vmatpush1.bf16.msra.mxu0 0
        %699 = vmatprep.subr.bf16.mxu0 0
        %700 = vmatpush1.bf16.msra.mxu0 0
        %701 = vmatprep.subr.bf16.mxu0 0
        %702 = vmatpush1.bf16.msra.mxu0 0
        %703 = vmatprep.subr.bf16.mxu0 0
        %704 = vmatpush1.bf16.msra.mxu0 0
        %705 = vmatprep.subr.bf16.mxu0 0
        %706 = vmatpush1.bf16.msra.mxu0 0
        %707 = vmatprep.subr.bf16.mxu0 0
        %708 = vmatpush1.bf16.msra.mxu0 0
        %709 = vmatprep.subr.bf16.mxu0 0
        %710 = vmatpush1.bf16.msra.mxu0 0
        %711 = vmatprep.subr.bf16.mxu0 0
        %712 = vmatpush1.bf16.msra.mxu0 0
        %713 = vmatprep.mubr.bf16.mxu0 0
        %714 = vmatmul.mubr.bf16.gmra.mrb[0].mxu0 %v616
        %v715 = vpop.f32.mrb[0].mxu0
        %v716 = vadd.f32 0.0, %v715
        %v717 = vpop.f32.mrb[0].mxu0
        %v718 = vpop.f32.mrb[0].mxu0
        %v719 = vadd.f32 0.0, %v718
        %v720 = vpop.f32.mrb[0].mxu0
        %721 = vdwg.mxu0
        %v722 = vadd.f32 %v614, %v716
        %v723 = vadd.f32 %v615, %v719
        %724 = vst [vmem:[#allocation2] sm:$0xff] %v722
        %725 = vst [vmem:[#allocation2 + $0x8] sm:$0xff] %v723
        %p726 = scmp.eq.s32.totalorder %s33, 1
        // Predicated region
        $region61: #{tpu_custom_call.1} parent=39 // pred_check
          %p727 = pneg %p726
        $region62: #{tpu_custom_call.1} parent=39 // pred_check_branch
          %729 = sbr.rel (%p727) target = $region64
        $region63: #{tpu_custom_call.1} parent=39 // pred_region
          %v730 = vld [vmem:[#allocation2] sm:$0xff]
          %v731 = vld [vmem:[#allocation2 + $0x8] sm:$0xff]
          %v732 = vld [vmem:[%s4] sm:$0x1]
          %v733 = vmul.f32 %v730, %v730
          %v734 = vmul.f32 %v731, %v731
          %735 = vadd.xlane.f32.xlu0 %v733
          %v736 = vpop.xlane.xlu0 %735
          %737 = vadd.xlane.f32.xlu0 %v734
          %v738 = vpop.xlane.xlu0 %737
          %v740 = vlaneseq
          %v741 = vshrl.u32 %v740, 7
          %v742 = vsub.s32 0, %v741
          %v743 = vrot.slane %v732, %v742
          %v745 = vmul.f32 %v730, %v743
          %v746 = vmul.f32 %v731, %v743
          %747 = vadd.xlane.f32.xlu0 %v745
          %v748 = vpop.xlane.xlu0 %747
          %749 = vadd.xlane.f32.xlu0 %v746
          %v750 = vpop.xlane.xlu0 %749
          %v751 = vrsqrt.pop %v736
          %v752 = vmul.f32 %v736, %v751
          %vm753 = vcmp.eq.f32.partialorder %v736, inf
          %v754 = vsel %vm753, %v736, %v752
          %vm755 = vcmp.eq.f32.partialorder %v736, 0.0
          %v756 = vand.u32 %v736, 2147483648
          %v757 = vsel %vm755, %v756, %v754
          %v758 = vrsqrt.pop %v738
          %v759 = vmul.f32 %v738, %v758
          %vm760 = vcmp.eq.f32.partialorder %v738, inf
          %v761 = vsel %vm760, %v738, %v759
          %vm762 = vcmp.eq.f32.partialorder %v738, 0.0
          %v763 = vand.u32 %v738, 2147483648
          %v764 = vsel %vm762, %v763, %v761
          %v765 = vmax.f32 %v736, 1e-24
          %v766 = vmax.f32 %v738, 1e-24
          %v767 = vrsqrt.pop %v765
          %v768 = vrsqrt.pop %v766
          %v769 = vsub.f32 0.0, %v748
          %v770 = vsub.f32 0.0, %v750
          %v771 = vmax.f32 %v757, 1e-08
          %v772 = vmax.f32 %v764, 1e-08
          %v773 = vrcp.pop %v771
          %v774 = vrcp.pop %v772
          %v775 = vmul.f32 %v769, %v773
          %v776 = vmul.f32 %v770, %v774
          %v777 = vmax.f32 %v775, 0.0
          %v778 = vmax.f32 %v776, 0.0
          %v779 = vadd.f32 %v777, 1.0
          %v780 = vadd.f32 %v778, 1.0
          %v781 = vmul.f32 %v779, 2.0
          %v782 = vmul.f32 %v780, 2.0
          %v783 = vmul.f32 %v781, %v743
          %v784 = vmul.f32 %v782, %v743
          %v785 = vmul.f32 %v730, %v767
          %v786 = vmul.f32 %v731, %v768
          %v787 = vadd.f32 %v785, %v783
          %v788 = vadd.f32 %v786, %v784
          %v789 = vmul.f32 %v787, %v787
          %v790 = vmul.f32 %v788, %v788
          %791 = vadd.xlane.f32.xlu0 %v789
          %v792 = vpop.xlane.xlu0 %791
          %793 = vadd.xlane.f32.xlu0 %v790
          %v794 = vpop.xlane.xlu0 %793
          %v795 = vmax.f32 %v792, 1e-24
          %v796 = vmax.f32 %v794, 1e-24
          %v797 = vrsqrt.pop %v795
          %v798 = vrsqrt.pop %v796
          %v799 = vmul.f32 %v797, %v757
          %v800 = vmul.f32 %v798, %v764
          %v801 = vmul.f32 %v787, %v799
          %v802 = vmul.f32 %v788, %v800
          %v803 = vpack.c.bf16 %v802, %v801
          %v805 = vunpack.c.l.b16 %v803
          %v806 = vunpack.c.h.b16 %v803
          %v807 = vpack.c.b16 %v805, %v805
          %v808 = vpack.c.b16 %v806, %v806
          %811 = vst [vmem:[%s369] sm:$0xf] %v807
          %812 = vst [vmem:[%s369 + $0x4] sm:$0xf] %v808
        $region64: #{tpu_custom_call.1} parent=39 // pred_fallthru
          _
        %s813 = sand.u32 %s173, 1
        %s814 = scalar_lea.sflag [#allocation5], %s813
        %s815 = sand.u32 %s173, 1
        %s816 = smul.addr %s815, 8
        %s817 = scalar_lea.vmem [#allocation11], %s816
        // Predicated region
        $region65: #{tpu_custom_call.1} parent=39 // pred_check
          %p818 = pneg %p183
        $region66: #{tpu_custom_call.1} parent=39 // pred_check_branch
          %820 = sbr.rel (%p818) target = $region68
        $region67: #{tpu_custom_call.1} parent=39 // pred_region
          %s821 = smul.u32 2, %s32
          %s823 = ssub.s32 128, 128
          %824 = vsyncadd %s814, %s823
          %s825 = smul.addr %s821, 64
          %s826 = scalar_lea.hbm %s5, %s825
          %s827 = sshll.u32 %s817, 4
          %s828 = int_to_ptr.vmem [resolvable:$true] %s827
          %833 = dma.vmem_to_hbm [thread:$0]  %s828, 128, %s826, %s814, 64, 64, 4
        $region68: #{tpu_custom_call.1} parent=39 // pred_fallthru
          _
      $region40: #{tpu_custom_call.1} parent=5 // pred_fallthru
        _
      %p834 = scmp.le.s32.totalorder 2, %s23
      // Predicated region
      $region69: #{tpu_custom_call.1} parent=5 // pred_check
        %p835 = pneg %p834
      $region70: #{tpu_custom_call.1} parent=5 // pred_check_branch
        %837 = sbr.rel (%p835) target = $region72
      $region71: #{tpu_custom_call.1} parent=5 // pred_region
        %s838 = ssub.s32 %s23, 2
        // Predicated region
        $region73: #{tpu_custom_call.1} parent=71 // pred_check
          %p839 = pneg %p189
        $region74: #{tpu_custom_call.1} parent=71 // pred_check_branch
          %841 = sbr.rel (%p839) target = $region76
        $region75: #{tpu_custom_call.1} parent=71 // pred_region
          %s842 = sand.u32 %s174, 1
          %s843 = scalar_lea.sflag [#allocation5], %s842
          %s844 = sand.u32 %s174, 1
          %s845 = smul.addr %s844, 8
          %s846 = scalar_lea.vmem [#allocation11], %s845
          %847 = dma.done %s843, 128
        $region76: #{tpu_custom_call.1} parent=71 // pred_fallthru
          _
      $region72: #{tpu_custom_call.1} parent=5 // pred_fallthru
        _
    $region6: #{tpu_custom_call.1} parent=1 // loop_footer
      %s27 = sadd.s32 1, %s23
    $region7: #{tpu_custom_call.1} parent=1 // loop_footer_branch
      %22 = sbr.rel target = $region3
    $region8: #{tpu_custom_call.1} parent=1 // loop_exit
      _
    %848 = vsyncpa [#allocation4], 1
    %s849 = scalar_lea.sflag [#allocation4], 1
    %850 = vsyncpa %s849, 1
    %851 = vsyncpa [#allocation7], 1
    %s852 = scalar_lea.sflag [#allocation7], 1
    %853 = vsyncpa %s852, 1
    %854 = vsyncpa [#allocation10], 1
    %s855 = scalar_lea.sflag [#allocation10], 1
    %856 = vsyncpa %s855, 1
    %857 = vsyncpa [#allocation5], 1
    %s858 = scalar_lea.sflag [#allocation5], 1
    %859 = vsyncpa %s858, 1

</llo_original>
